<compile_context>
chip_gen: v5e
topology: v5e:2x2
jax: 0.10.0
libtpu: 0.0.40
codegen_flags: <defaults>
</compile_context>

<pallas_src>
import functools

import jax
import jax.numpy as jnp
from jax.experimental import pallas as pl
from jax.experimental.pallas import tpu as pltpu


def _round_up(a, b):
    return (a + b - 1) // b * b


def _dwconv_kernel(x_ref, w_ref, b_ref, o_ref, *, KH, KW, W, L):
    # x_ref : (R_blk, Lp)      zero-padded, flattened (H*W) input planes (one per output plane)
    # w_ref : (R_blk, KH*KW)   per-row taps (row r corresponds to output plane r)
    # b_ref : (R_blk, 1)
    # o_ref : (R_blk, L)       L = H*W; wrapper crops to (Hout, Wout)
    x = x_ref[...].astype(jnp.float32)
    acc = jnp.zeros((x.shape[0], L), jnp.float32)
    for kh in range(KH):
        for kw in range(KW):
            s = kh * W + kw                               # flattened window shift
            t = kh * KW + kw                              # tap index
            tap = w_ref[:, t:t + 1].astype(jnp.float32)   # (R_blk, 1) -> lane broadcast
            acc = acc + x[:, s:s + L] * tap
    # bias folded into the single dense store
    o_ref[...] = (acc + b_ref[...].astype(jnp.float32)).astype(o_ref.dtype)


@functools.partial(jax.jit, static_argnames=("depthwise_multiplier",))
def depthwise_conv2d(x, weight, bias, *, depthwise_multiplier):
    """Valid (no padding), stride-1 depthwise conv matching nn.Conv2d(groups=C_in)."""
    N, C, H, W = x.shape
    M = depthwise_multiplier
    Cout, _, KH, KW = weight.shape
    assert Cout == C * M
    Hout, Wout = H - KH + 1, W - KW + 1

    L = H * W
    # pad flattened axis so every shifted window is a plain in-bounds slice, and so the
    # input block's last dim is a multiple of 128 (lane-dense)
    Lp = _round_up(L + (KH - 1) * W + (KW - 1), 128)
    R = N * C * M                                          # one row per output plane

    # Row block sized so (input block + f32 accumulator) stays within a few dozen vregs;
    # small problems collapse to a single grid step.
    max_rows = max(8, ((32 * 1024) // (L + Lp)) // 8 * 8)
    R_blk = min(_round_up(R, 8), max_rows)
    R_pad = _round_up(R, R_blk)

    # rows ordered (n, c, m)  ->  output channel c*M + m  (PyTorch group-major)
    x_rows = jnp.repeat(x.reshape(N * C, L), M, axis=0)
    x_rows = jnp.pad(x_rows, ((0, R_pad - R), (0, Lp - L)))

    w_rows = jnp.tile(weight.reshape(C * M, KH * KW), (N, 1))
    w_rows = jnp.pad(w_rows, ((0, R_pad - R), (0, 0)))
    b_rows = jnp.tile(bias.reshape(C * M, 1), (N, 1))
    b_rows = jnp.pad(b_rows, ((0, R_pad - R), (0, 0)))

    kernel = functools.partial(_dwconv_kernel, KH=KH, KW=KW, W=W, L=L)

    out_rows = pl.pallas_call(
        kernel,
        out_shape=jax.ShapeDtypeStruct((R_pad, L), x.dtype),
        grid_spec=pltpu.PrefetchScalarGridSpec(
            num_scalar_prefetch=0,
            grid=(R_pad // R_blk,),
            in_specs=[
                pl.BlockSpec((R_blk, Lp), lambda i: (i, 0)),
                pl.BlockSpec((R_blk, KH * KW), lambda i: (i, 0)),
                pl.BlockSpec((R_blk, 1), lambda i: (i, 0)),
            ],
            out_specs=pl.BlockSpec((R_blk, L), lambda i: (i, 0)),
        ),
        compiler_params=pltpu.CompilerParams(
            dimension_semantics=("parallel",),
        ),
    )(x_rows, w_rows, b_rows)

    # crop the valid window and restore NCHW with group-major channel ordering
    return out_rows[:R].reshape(N, C * M, H, W)[:, :, :Hout, :Wout]


if __name__ == "__main__":
    # module config (small, consistent with the forward pass)
    in_channels = 4
    kernel_size = 3
    depthwise_multiplier = 2
    N, H, W = 2, 16, 16

    key = jax.random.PRNGKey(0)
    kx, kw, kb = jax.random.split(key, 3)

    x = jax.random.normal(kx, (N, in_channels, H, W), dtype=jnp.float32)

    # deterministic init mimicking nn.Conv2d defaults: U(-1/sqrt(fan_in), 1/sqrt(fan_in))
    fan_in = 1 * kernel_size * kernel_size  # in_channels_per_group * KH * KW
    bound = 1.0 / jnp.sqrt(jnp.float32(fan_in))
    weight = jax.random.uniform(
        kw,
        (in_channels * depthwise_multiplier, 1, kernel_size, kernel_size),
        minval=-bound,
        maxval=bound,
        dtype=jnp.float32,
    )
    bias = jax.random.uniform(
        kb,
        (in_channels * depthwise_multiplier,),
        minval=-bound,
        maxval=bound,
        dtype=jnp.float32,
    )

    out = depthwise_conv2d(x, weight, bias, depthwise_multiplier=depthwise_multiplier)
    out = jax.block_until_ready(out)

    # reference (plain JAX) for semantics check
    ref = jax.lax.conv_general_dilated(
        x,
        weight,
        window_strides=(1, 1),
        padding="VALID",
        feature_group_count=in_channels,
        dimension_numbers=("NCHW", "OIHW", "NCHW"),
        precision=jax.lax.Precision.HIGHEST,
    ) + bias.reshape(1, -1, 1, 1)

    assert out.shape == (
        N,
        in_channels * depthwise_multiplier,
        H - kernel_size + 1,
        W - kernel_size + 1,
    )
    assert jnp.allclose(out, ref, atol=1e-5, rtol=1e-5)
    print("KERNEL_OK")
</pallas_src>

<mosaic_0001>
module attributes {stable_mosaic.version = 11 : i64} {
  func.func @_dwconv_kernel(%arg0: i32, %arg1: memref<16x384xf32, #tpu.memory_space<vmem>>, %arg2: memref<16x9xf32, #tpu.memory_space<vmem>>, %arg3: memref<16x1xf32, #tpu.memory_space<vmem>>, %arg4: memref<16x256xf32, #tpu.memory_space<vmem>>) attributes {dimension_semantics = [#tpu.dimension_semantics<parallel>], iteration_bounds = array<i64: 1>, scalar_prefetch = 0 : i64, scratch_operands = 0 : i64, tpu.core_type = #tpu.core_type<tc>, window_params = [{transform_indices = @transform_0, window_bounds = array<i64: 16, 384>}, {transform_indices = @transform_1, window_bounds = array<i64: 16, 9>}, {transform_indices = @transform_2, window_bounds = array<i64: 16, 1>}, {transform_indices = @transform_3, window_bounds = array<i64: 16, 256>}]} {
    %c0 = arith.constant 0 : index
    %c0_0 = arith.constant 0 : index
    %0 = vector.load %arg1[%c0, %c0_0] : memref<16x384xf32, #tpu.memory_space<vmem>>, vector<16x384xf32>
    %cst = arith.constant 0.000000e+00 : f32
    %1 = vector.broadcast %cst : f32 to vector<16x256xf32>
    %c0_1 = arith.constant 0 : index
    %c0_2 = arith.constant 0 : index
    %2 = vector.load %arg2[%c0_1, %c0_2] : memref<16x9xf32, #tpu.memory_space<vmem>>, vector<16x1xf32>
    %3 = vector.extract_strided_slice %0 {offsets = [0, 0], sizes = [16, 256], strides = [1, 1]} : vector<16x384xf32> to vector<16x256xf32>
    %4 = vector.broadcast %2 : vector<16x1xf32> to vector<16x256xf32>
    %5 = arith.mulf %3, %4 : vector<16x256xf32>
    %6 = arith.addf %1, %5 : vector<16x256xf32>
    %c0_3 = arith.constant 0 : index
    %c1 = arith.constant 1 : index
    %7 = vector.load %arg2[%c0_3, %c1] : memref<16x9xf32, #tpu.memory_space<vmem>>, vector<16x1xf32>
    %8 = vector.extract_strided_slice %0 {offsets = [0, 1], sizes = [16, 256], strides = [1, 1]} : vector<16x384xf32> to vector<16x256xf32>
    %9 = vector.broadcast %7 : vector<16x1xf32> to vector<16x256xf32>
    %10 = arith.mulf %8, %9 : vector<16x256xf32>
    %11 = arith.addf %6, %10 : vector<16x256xf32>
    %c0_4 = arith.constant 0 : index
    %c2 = arith.constant 2 : index
    %12 = vector.load %arg2[%c0_4, %c2] : memref<16x9xf32, #tpu.memory_space<vmem>>, vector<16x1xf32>
    %13 = vector.extract_strided_slice %0 {offsets = [0, 2], sizes = [16, 256], strides = [1, 1]} : vector<16x384xf32> to vector<16x256xf32>
    %14 = vector.broadcast %12 : vector<16x1xf32> to vector<16x256xf32>
    %15 = arith.mulf %13, %14 : vector<16x256xf32>
    %16 = arith.addf %11, %15 : vector<16x256xf32>
    %c0_5 = arith.constant 0 : index
    %c3 = arith.constant 3 : index
    %17 = vector.load %arg2[%c0_5, %c3] : memref<16x9xf32, #tpu.memory_space<vmem>>, vector<16x1xf32>
    %18 = vector.extract_strided_slice %0 {offsets = [0, 16], sizes = [16, 256], strides = [1, 1]} : vector<16x384xf32> to vector<16x256xf32>
    %19 = vector.broadcast %17 : vector<16x1xf32> to vector<16x256xf32>
    %20 = arith.mulf %18, %19 : vector<16x256xf32>
    %21 = arith.addf %16, %20 : vector<16x256xf32>
    %c0_6 = arith.constant 0 : index
    %c4 = arith.constant 4 : index
    %22 = vector.load %arg2[%c0_6, %c4] : memref<16x9xf32, #tpu.memory_space<vmem>>, vector<16x1xf32>
    %23 = vector.extract_strided_slice %0 {offsets = [0, 17], sizes = [16, 256], strides = [1, 1]} : vector<16x384xf32> to vector<16x256xf32>
    %24 = vector.broadcast %22 : vector<16x1xf32> to vector<16x256xf32>
    %25 = arith.mulf %23, %24 : vector<16x256xf32>
    %26 = arith.addf %21, %25 : vector<16x256xf32>
    %c0_7 = arith.constant 0 : index
    %c5 = arith.constant 5 : index
    %27 = vector.load %arg2[%c0_7, %c5] : memref<16x9xf32, #tpu.memory_space<vmem>>, vector<16x1xf32>
    %28 = vector.extract_strided_slice %0 {offsets = [0, 18], sizes = [16, 256], strides = [1, 1]} : vector<16x384xf32> to vector<16x256xf32>
    %29 = vector.broadcast %27 : vector<16x1xf32> to vector<16x256xf32>
    %30 = arith.mulf %28, %29 : vector<16x256xf32>
    %31 = arith.addf %26, %30 : vector<16x256xf32>
    %c0_8 = arith.constant 0 : index
    %c6 = arith.constant 6 : index
    %32 = vector.load %arg2[%c0_8, %c6] : memref<16x9xf32, #tpu.memory_space<vmem>>, vector<16x1xf32>
    %33 = vector.extract_strided_slice %0 {offsets = [0, 32], sizes = [16, 256], strides = [1, 1]} : vector<16x384xf32> to vector<16x256xf32>
    %34 = vector.broadcast %32 : vector<16x1xf32> to vector<16x256xf32>
    %35 = arith.mulf %33, %34 : vector<16x256xf32>
    %36 = arith.addf %31, %35 : vector<16x256xf32>
    %c0_9 = arith.constant 0 : index
    %c7 = arith.constant 7 : index
    %37 = vector.load %arg2[%c0_9, %c7] : memref<16x9xf32, #tpu.memory_space<vmem>>, vector<16x1xf32>
    %38 = vector.extract_strided_slice %0 {offsets = [0, 33], sizes = [16, 256], strides = [1, 1]} : vector<16x384xf32> to vector<16x256xf32>
    %39 = vector.broadcast %37 : vector<16x1xf32> to vector<16x256xf32>
    %40 = arith.mulf %38, %39 : vector<16x256xf32>
    %41 = arith.addf %36, %40 : vector<16x256xf32>
    %c0_10 = arith.constant 0 : index
    %c8 = arith.constant 8 : index
    %42 = vector.load %arg2[%c0_10, %c8] : memref<16x9xf32, #tpu.memory_space<vmem>>, vector<16x1xf32>
    %43 = vector.extract_strided_slice %0 {offsets = [0, 34], sizes = [16, 256], strides = [1, 1]} : vector<16x384xf32> to vector<16x256xf32>
    %44 = vector.broadcast %42 : vector<16x1xf32> to vector<16x256xf32>
    %45 = arith.mulf %43, %44 : vector<16x256xf32>
    %46 = arith.addf %41, %45 : vector<16x256xf32>
    %c0_11 = arith.constant 0 : index
    %c0_12 = arith.constant 0 : index
    %47 = vector.load %arg3[%c0_11, %c0_12] : memref<16x1xf32, #tpu.memory_space<vmem>>, vector<16x1xf32>
    %48 = vector.broadcast %47 : vector<16x1xf32> to vector<16x256xf32>
    %49 = arith.addf %46, %48 : vector<16x256xf32>
    %c0_13 = arith.constant 0 : index
    %c0_14 = arith.constant 0 : index
    %50 = vector.load %arg4[%c0_13, %c0_14] : memref<16x256xf32, #tpu.memory_space<vmem>>, vector<16x256xf32>
    tpu.vector_store %arg4[%c0_13, %c0_14], %49 {strides = array<i32>} : memref<16x256xf32, #tpu.memory_space<vmem>>, vector<16x256xf32>,
    return
  }
  func.func @transform_0(%arg0: i32) -> (i32, i32) {
    %c0_i32 = arith.constant 0 : i32
    %c0_i32_0 = arith.constant 0 : i32
    return %arg0, %c0_i32 : i32, i32
  }
  func.func @transform_1(%arg0: i32) -> (i32, i32) {
    %c0_i32 = arith.constant 0 : i32
    %c0_i32_0 = arith.constant 0 : i32
    return %arg0, %c0_i32 : i32, i32
  }
  func.func @transform_2(%arg0: i32) -> (i32, i32) {
    %c0_i32 = arith.constant 0 : i32
    %c0_i32_0 = arith.constant 0 : i32
    return %arg0, %c0_i32 : i32, i32
  }
  func.func @transform_3(%arg0: i32) -> (i32, i32) {
    %c0_i32 = arith.constant 0 : i32
    %c0_i32_0 = arith.constant 0 : i32
    return %arg0, %c0_i32 : i32, i32
  }
}

</mosaic_0001>

<llo_original>
// kernel: depthwise_conv2d.1
$region0: #{depthwise_conv2d.1}
  #allocation0 [shape = 'u32[]', space=smem, size = 0x4, offset = 0x4, fixed_abs, tag = 'smem constant byte address 0x4 - core index']
  #allocation1 [shape = 'u32[72,128]{1,0:T(1,128)}', space=vmem, size = 0x9000, scoped, tag = 'internal scratch']
  %s0 = inlined_call_operand.vmem [shape: f32[16,384], index: 0, kind: input, shape index: {}]
  %s1 = inlined_call_operand.vmem [shape: f32[16,9], index: 1, kind: input, shape index: {}]
  %s2 = inlined_call_operand.vmem [shape: f32[16,1], index: 2, kind: input, shape index: {}]
  %s3 = inlined_call_operand.vmem [shape: f32[16,256], index: 3, kind: output, shape index: {}]
  %s4 = sld [smem:[#allocation0]]
  $region22: #{depthwise_conv2d.1} parent=0
    _
  %s6 = ssub.s32 1, %s4
  %s7 = scalar_select 0, %s6, %s4
  // Predicated region
  $region2: #{depthwise_conv2d.1} parent=0 // pred_check
    _
  $region3: #{depthwise_conv2d.1} parent=0 // pred_check_branch
    %9 = sbr.rel (0) target = $region5
  $region4: #{depthwise_conv2d.1} parent=0 // pred_region
    _
  $region5: #{depthwise_conv2d.1} parent=0 // pred_fallthru
    _
  // Predicated region
  $region6: #{depthwise_conv2d.1} parent=0 // pred_check
    _
  $region7: #{depthwise_conv2d.1} parent=0 // pred_check_branch
    %11 = sbr.rel (0) target = $region9
  $region8: #{depthwise_conv2d.1} parent=0 // pred_region
    _
  $region9: #{depthwise_conv2d.1} parent=0 // pred_fallthru
    _
  // Predicated region
  $region10: #{depthwise_conv2d.1} parent=0 // pred_check
    _
  $region11: #{depthwise_conv2d.1} parent=0 // pred_check_branch
    %13 = sbr.rel (0) target = $region13
  $region12: #{depthwise_conv2d.1} parent=0 // pred_region
    _
  $region13: #{depthwise_conv2d.1} parent=0 // pred_fallthru
    _
  %v14 = vld [vmem:[%s0] sm:$0xff]
  %v15 = vld [vmem:[%s0 + $0x8] sm:$0xff]
  %v16 = vld [vmem:[%s0 + $0x10] sm:$0xff]
  %v17 = vld [vmem:[%s0 + $0x18] sm:$0xff]
  %v18 = vld [vmem:[%s0 + $0x20] sm:$0xff]
  %v19 = vld [vmem:[%s0 + $0x28] sm:$0xff]
  %v20 = vld [vmem:[%s1] sm:$0xff]
  %v21 = vld [vmem:[%s1 + $0x8] sm:$0xff]
  %23 = vset.pattern.permute.xlu0 0
  %24 = vperm.xlu0 %23, %v20
  %v25 = vpop.permute.xlu0 %24
  %28 = vset.pattern.permute.xlu0 0
  %29 = vperm.xlu0 %28, %v21
  %v30 = vpop.permute.xlu0 %29
  %v32 = vmul.f32 %v14, %v25
  %v33 = vmul.f32 %v15, %v25
  %v34 = vmul.f32 %v17, %v30
  %v35 = vmul.f32 %v18, %v30
  %v36 = vadd.f32 %v32, 0.0
  %v37 = vadd.f32 %v33, 0.0
  %v38 = vadd.f32 %v34, 0.0
  %v39 = vadd.f32 %v35, 0.0
  %40 = vset.pattern.permute.xlu0 1
  %41 = vperm.xlu0 %40, %v20
  %v42 = vpop.permute.xlu0 %41
  %44 = vset.pattern.permute.xlu0 1
  %45 = vperm.xlu0 %44, %v21
  %v46 = vpop.permute.xlu0 %45
  %v48 = vmul.f32 %v14, %v42
  %v49 = vmul.f32 %v15, %v42
  %v50 = vmul.f32 %v16, %v42
  %v51 = vmul.f32 %v17, %v46
  %v52 = vmul.f32 %v18, %v46
  %v53 = vmul.f32 %v19, %v46
  %60 = vrot.lane.b32.xlu0 %v48, 127
  %v61 = vpop.permute.xlu0 %60
  %62 = vrot.lane.b32.xlu0 %v49, 127
  %v63 = vpop.permute.xlu0 %62
  %64 = vrot.lane.b32.xlu0 %v50, 127
  %v65 = vpop.permute.xlu0 %64
  %66 = vrot.lane.b32.xlu0 %v51, 127
  %v67 = vpop.permute.xlu0 %66
  %68 = vrot.lane.b32.xlu0 %v52, 127
  %v69 = vpop.permute.xlu0 %68
  %70 = vrot.lane.b32.xlu0 %v53, 127
  %v71 = vpop.permute.xlu0 %70
  %vm72 = vcmask 1039360
  %v73 = vsel %vm72, %v61, %v63
  %v74 = vsel %vm72, %v63, %v65
  %v75 = vsel %vm72, %v67, %v69
  %v76 = vsel %vm72, %v69, %v71
  %v81 = vadd.f32 %v36, %v73
  %v82 = vadd.f32 %v37, %v74
  %v83 = vadd.f32 %v38, %v75
  %v84 = vadd.f32 %v39, %v76
  %85 = vset.pattern.permute.xlu0 2
  %86 = vperm.xlu0 %85, %v20
  %v87 = vpop.permute.xlu0 %86
  %89 = vset.pattern.permute.xlu0 2
  %90 = vperm.xlu0 %89, %v21
  %v91 = vpop.permute.xlu0 %90
  %v93 = vmul.f32 %v14, %v87
  %v94 = vmul.f32 %v15, %v87
  %v95 = vmul.f32 %v16, %v87
  %v96 = vmul.f32 %v17, %v91
  %v97 = vmul.f32 %v18, %v91
  %v98 = vmul.f32 %v19, %v91
  %105 = vrot.lane.b32.xlu0 %v93, 126
  %v106 = vpop.permute.xlu0 %105
  %107 = vrot.lane.b32.xlu0 %v94, 126
  %v108 = vpop.permute.xlu0 %107
  %109 = vrot.lane.b32.xlu0 %v95, 126
  %v110 = vpop.permute.xlu0 %109
  %111 = vrot.lane.b32.xlu0 %v96, 126
  %v112 = vpop.permute.xlu0 %111
  %113 = vrot.lane.b32.xlu0 %v97, 126
  %v114 = vpop.permute.xlu0 %113
  %115 = vrot.lane.b32.xlu0 %v98, 126
  %v116 = vpop.permute.xlu0 %115
  %vm117 = vcmask 1031168
  %v118 = vsel %vm117, %v106, %v108
  %v119 = vsel %vm117, %v108, %v110
  %v120 = vsel %vm117, %v112, %v114
  %v121 = vsel %vm117, %v114, %v116
  %v126 = vadd.f32 %v81, %v118
  %v127 = vadd.f32 %v82, %v119
  %v128 = vadd.f32 %v83, %v120
  %v129 = vadd.f32 %v84, %v121
  %130 = vset.pattern.permute.xlu0 3
  %131 = vperm.xlu0 %130, %v20
  %v132 = vpop.permute.xlu0 %131
  %134 = vset.pattern.permute.xlu0 3
  %135 = vperm.xlu0 %134, %v21
  %v136 = vpop.permute.xlu0 %135
  %v138 = vmul.f32 %v14, %v132
  %v139 = vmul.f32 %v15, %v132
  %v140 = vmul.f32 %v16, %v132
  %v141 = vmul.f32 %v17, %v136
  %v142 = vmul.f32 %v18, %v136
  %v143 = vmul.f32 %v19, %v136
  %150 = vrot.lane.b32.xlu0 %v138, 112
  %v151 = vpop.permute.xlu0 %150
  %152 = vrot.lane.b32.xlu0 %v139, 112
  %v153 = vpop.permute.xlu0 %152
  %154 = vrot.lane.b32.xlu0 %v140, 112
  %v155 = vpop.permute.xlu0 %154
  %156 = vrot.lane.b32.xlu0 %v141, 112
  %v157 = vpop.permute.xlu0 %156
  %158 = vrot.lane.b32.xlu0 %v142, 112
  %v159 = vpop.permute.xlu0 %158
  %160 = vrot.lane.b32.xlu0 %v143, 112
  %v161 = vpop.permute.xlu0 %160
  %vm162 = vcmask 916480
  %v163 = vsel %vm162, %v151, %v153
  %v164 = vsel %vm162, %v153, %v155
  %v165 = vsel %vm162, %v157, %v159
  %v166 = vsel %vm162, %v159, %v161
  %v171 = vadd.f32 %v126, %v163
  %v172 = vadd.f32 %v127, %v164
  %v173 = vadd.f32 %v128, %v165
  %v174 = vadd.f32 %v129, %v166
  %175 = vset.pattern.permute.xlu0 4
  %176 = vperm.xlu0 %175, %v20
  %v177 = vpop.permute.xlu0 %176
  %179 = vset.pattern.permute.xlu0 4
  %180 = vperm.xlu0 %179, %v21
  %v181 = vpop.permute.xlu0 %180
  %v183 = vmul.f32 %v14, %v177
  %v184 = vmul.f32 %v15, %v177
  %v185 = vmul.f32 %v16, %v177
  %v186 = vmul.f32 %v17, %v181
  %v187 = vmul.f32 %v18, %v181
  %v188 = vmul.f32 %v19, %v181
  %195 = vrot.lane.b32.xlu0 %v183, 111
  %v196 = vpop.permute.xlu0 %195
  %197 = vrot.lane.b32.xlu0 %v184, 111
  %v198 = vpop.permute.xlu0 %197
  %199 = vrot.lane.b32.xlu0 %v185, 111
  %v200 = vpop.permute.xlu0 %199
  %201 = vrot.lane.b32.xlu0 %v186, 111
  %v202 = vpop.permute.xlu0 %201
  %203 = vrot.lane.b32.xlu0 %v187, 111
  %v204 = vpop.permute.xlu0 %203
  %205 = vrot.lane.b32.xlu0 %v188, 111
  %v206 = vpop.permute.xlu0 %205
  %vm207 = vcmask 908288
  %v208 = vsel %vm207, %v196, %v198
  %v209 = vsel %vm207, %v198, %v200
  %v210 = vsel %vm207, %v202, %v204
  %v211 = vsel %vm207, %v204, %v206
  %v216 = vadd.f32 %v171, %v208
  %v217 = vadd.f32 %v172, %v209
  %v218 = vadd.f32 %v173, %v210
  %v219 = vadd.f32 %v174, %v211
  %220 = vset.pattern.permute.xlu0 5
  %221 = vperm.xlu0 %220, %v20
  %v222 = vpop.permute.xlu0 %221
  %224 = vset.pattern.permute.xlu0 5
  %225 = vperm.xlu0 %224, %v21
  %v226 = vpop.permute.xlu0 %225
  %v228 = vmul.f32 %v14, %v222
  %v229 = vmul.f32 %v15, %v222
  %v230 = vmul.f32 %v16, %v222
  %v231 = vmul.f32 %v17, %v226
  %v232 = vmul.f32 %v18, %v226
  %v233 = vmul.f32 %v19, %v226
  %240 = vrot.lane.b32.xlu0 %v228, 110
  %v241 = vpop.permute.xlu0 %240
  %242 = vrot.lane.b32.xlu0 %v229, 110
  %v243 = vpop.permute.xlu0 %242
  %244 = vrot.lane.b32.xlu0 %v230, 110
  %v245 = vpop.permute.xlu0 %244
  %246 = vrot.lane.b32.xlu0 %v231, 110
  %v247 = vpop.permute.xlu0 %246
  %248 = vrot.lane.b32.xlu0 %v232, 110
  %v249 = vpop.permute.xlu0 %248
  %250 = vrot.lane.b32.xlu0 %v233, 110
  %v251 = vpop.permute.xlu0 %250
  %vm252 = vcmask 900096
  %v253 = vsel %vm252, %v241, %v243
  %v254 = vsel %vm252, %v243, %v245
  %v255 = vsel %vm252, %v247, %v249
  %v256 = vsel %vm252, %v249, %v251
  %v261 = vadd.f32 %v216, %v253
  %v262 = vadd.f32 %v217, %v254
  %v263 = vadd.f32 %v218, %v255
  %v264 = vadd.f32 %v219, %v256
  %265 = vset.pattern.permute.xlu0 6
  %266 = vperm.xlu0 %265, %v20
  %v267 = vpop.permute.xlu0 %266
  %269 = vset.pattern.permute.xlu0 6
  %270 = vperm.xlu0 %269, %v21
  %v271 = vpop.permute.xlu0 %270
  %v273 = vmul.f32 %v14, %v267
  %v274 = vmul.f32 %v15, %v267
  %v275 = vmul.f32 %v16, %v267
  %v276 = vmul.f32 %v17, %v271
  %v277 = vmul.f32 %v18, %v271
  %v278 = vmul.f32 %v19, %v271
  %285 = vrot.lane.b32.xlu0 %v273, 96
  %v286 = vpop.permute.xlu0 %285
  %287 = vrot.lane.b32.xlu0 %v274, 96
  %v288 = vpop.permute.xlu0 %287
  %289 = vrot.lane.b32.xlu0 %v275, 96
  %v290 = vpop.permute.xlu0 %289
  %291 = vrot.lane.b32.xlu0 %v276, 96
  %v292 = vpop.permute.xlu0 %291
  %293 = vrot.lane.b32.xlu0 %v277, 96
  %v294 = vpop.permute.xlu0 %293
  %295 = vrot.lane.b32.xlu0 %v278, 96
  %v296 = vpop.permute.xlu0 %295
  %vm297 = vcmask 785408
  %v298 = vsel %vm297, %v286, %v288
  %v299 = vsel %vm297, %v288, %v290
  %v300 = vsel %vm297, %v292, %v294
  %v301 = vsel %vm297, %v294, %v296
  %v306 = vadd.f32 %v261, %v298
  %v307 = vadd.f32 %v262, %v299
  %v308 = vadd.f32 %v263, %v300
  %v309 = vadd.f32 %v264, %v301
  %310 = vset.pattern.permute.xlu0 7
  %311 = vperm.xlu0 %310, %v20
  %v312 = vpop.permute.xlu0 %311
  %314 = vset.pattern.permute.xlu0 7
  %315 = vperm.xlu0 %314, %v21
  %v316 = vpop.permute.xlu0 %315
  %v318 = vmul.f32 %v14, %v312
  %v319 = vmul.f32 %v15, %v312
  %v320 = vmul.f32 %v16, %v312
  %v321 = vmul.f32 %v17, %v316
  %v322 = vmul.f32 %v18, %v316
  %v323 = vmul.f32 %v19, %v316
  %330 = vrot.lane.b32.xlu0 %v318, 95
  %v331 = vpop.permute.xlu0 %330
  %332 = vrot.lane.b32.xlu0 %v319, 95
  %v333 = vpop.permute.xlu0 %332
  %334 = vrot.lane.b32.xlu0 %v320, 95
  %v335 = vpop.permute.xlu0 %334
  %336 = vrot.lane.b32.xlu0 %v321, 95
  %v337 = vpop.permute.xlu0 %336
  %338 = vrot.lane.b32.xlu0 %v322, 95
  %v339 = vpop.permute.xlu0 %338
  %340 = vrot.lane.b32.xlu0 %v323, 95
  %v341 = vpop.permute.xlu0 %340
  %vm342 = vcmask 777216
  %v343 = vsel %vm342, %v331, %v333
  %v344 = vsel %vm342, %v333, %v335
  %v345 = vsel %vm342, %v337, %v339
  %v346 = vsel %vm342, %v339, %v341
  %v351 = vadd.f32 %v306, %v343
  %v352 = vadd.f32 %v307, %v344
  %v353 = vadd.f32 %v308, %v345
  %v354 = vadd.f32 %v309, %v346
  %355 = vset.pattern.permute.xlu0 8
  %356 = vperm.xlu0 %355, %v20
  %v357 = vpop.permute.xlu0 %356
  %359 = vset.pattern.permute.xlu0 8
  %360 = vperm.xlu0 %359, %v21
  %v361 = vpop.permute.xlu0 %360
  %v363 = vmul.f32 %v14, %v357
  %v364 = vmul.f32 %v15, %v357
  %v365 = vmul.f32 %v16, %v357
  %v366 = vmul.f32 %v17, %v361
  %v367 = vmul.f32 %v18, %v361
  %v368 = vmul.f32 %v19, %v361
  %375 = vrot.lane.b32.xlu0 %v363, 94
  %v376 = vpop.permute.xlu0 %375
  %377 = vrot.lane.b32.xlu0 %v364, 94
  %v378 = vpop.permute.xlu0 %377
  %379 = vrot.lane.b32.xlu0 %v365, 94
  %v380 = vpop.permute.xlu0 %379
  %381 = vrot.lane.b32.xlu0 %v366, 94
  %v382 = vpop.permute.xlu0 %381
  %383 = vrot.lane.b32.xlu0 %v367, 94
  %v384 = vpop.permute.xlu0 %383
  %385 = vrot.lane.b32.xlu0 %v368, 94
  %v386 = vpop.permute.xlu0 %385
  %vm387 = vcmask 769024
  %v388 = vsel %vm387, %v376, %v378
  %v389 = vsel %vm387, %v378, %v380
  %v390 = vsel %vm387, %v382, %v384
  %v391 = vsel %vm387, %v384, %v386
  %v396 = vadd.f32 %v351, %v388
  %v397 = vadd.f32 %v352, %v389
  %v398 = vadd.f32 %v353, %v390
  %v399 = vadd.f32 %v354, %v391
  %v400 = vld [vmem:[%s2] sm:$0xff]
  %v401 = vld [vmem:[%s2 + $0x8] sm:$0xff]
  %403 = vset.pattern.permute.xlu0 0
  %404 = vperm.xlu0 %403, %v400
  %v405 = vpop.permute.xlu0 %404
  %408 = vset.pattern.permute.xlu0 0
  %409 = vperm.xlu0 %408, %v401
  %v410 = vpop.permute.xlu0 %409
  %v412 = vadd.f32 %v396, %v405
  %v413 = vadd.f32 %v397, %v405
  %v414 = vadd.f32 %v398, %v410
  %v415 = vadd.f32 %v399, %v410
  %416 = vst [vmem:[%s3] sm:$0xff] %v412
  %417 = vst [vmem:[%s3 + $0x8] sm:$0xff] %v413
  %418 = vst [vmem:[%s3 + $0x10] sm:$0xff] %v414
  %419 = vst [vmem:[%s3 + $0x18] sm:$0xff] %v415
  // Predicated region
  $region14: #{depthwise_conv2d.1} parent=0 // pred_check
    _
  $region15: #{depthwise_conv2d.1} parent=0 // pred_check_branch
    %421 = sbr.rel (0) target = $region17
  $region16: #{depthwise_conv2d.1} parent=0 // pred_region
    _
  $region17: #{depthwise_conv2d.1} parent=0 // pred_fallthru
    _
  // Predicated region
  $region18: #{depthwise_conv2d.1} parent=0 // pred_check
    _
  $region19: #{depthwise_conv2d.1} parent=0 // pred_check_branch
    %423 = sbr.rel (0) target = $region21
  $region20: #{depthwise_conv2d.1} parent=0 // pred_region
    _
  $region21: #{depthwise_conv2d.1} parent=0 // pred_fallthru
    _

</llo_original>
